<compile_context>
chip_gen: v6e
topology: v6e:2x2x1
jax: 0.10.0
libtpu: 0.0.40
codegen_flags: <defaults>
</compile_context>

<pallas_src>
import functools
import math

import jax
import jax.numpy as jnp
from jax.experimental import pallas as pl
from jax.experimental.pallas import tpu as pltpu


_LOG_CLIP = math.log(1e-5)


def _round_up(x, m):
    return (x + m - 1) // m * m


def _gen_loss_kernel(node_ref, neigh_ref, bias_ref, reward_ref, loss_ref,
                     ce_acc, l2_acc, *, lambda_gen, inv_batch):
    """Processes one (TB, D) tile of the batch; accumulates across the grid."""
    t = pl.program_id(0)

    @pl.when(t == 0)
    def _init():
        ce_acc[...] = jnp.zeros_like(ce_acc)
        l2_acc[...] = jnp.zeros_like(l2_acc)

    ne = node_ref[...].astype(jnp.float32)         # (TB, D)
    nb = neigh_ref[...].astype(jnp.float32)        # (TB, D)
    bias = bias_ref[...].astype(jnp.float32)       # (TB, 1) sublane-major
    reward = reward_ref[...].astype(jnp.float32)   # (TB, 1) cast in-kernel

    # Row-wise dot product kept in (TB, 1) sublane orientation; no (1, B)
    # relayout / transpose.
    score = jnp.sum(ne * nb, axis=1, keepdims=True) + bias      # (TB, 1)

    # log(clip(sigmoid(s), 1e-5, 1)) == max(log_sigmoid(s), log(1e-5)):
    # sigmoid <= 1 so the upper clip never bites; stable for large |s|.
    log_prob = jnp.maximum(jax.nn.log_sigmoid(score), _LOG_CLIP)
    ce_acc[...] = ce_acc[...] + jnp.sum(log_prob * reward)

    # l2_loss(t) = 0.5 * sum(t**2); accumulate raw sums, scale at the end.
    sq = ne * ne + nb * nb
    l2_acc[...] = l2_acc[...] + jnp.sum(sq) + jnp.sum(bias * bias)

    @pl.when(t == pl.num_programs(0) - 1)
    def _finalize():
        # TODO(synk): a (1,1) SMEM output would avoid the lane-sparse VMEM
        # store, but vector->scalar SMEM stores of reduced values are not
        # reliably lowered; keep the (1,1) VMEM block (negligible cost).
        loss_ref[...] = (-ce_acc[...] * inv_batch
                         + (0.5 * float(lambda_gen)) * l2_acc[...])


def generator_loss(node_emd, bias_vector, node_ids, neighbor_ids, reward,
                   lambda_gen, *, max_tile_b=512):
    """Pallas-backed equivalent of Generator.forward (float32)."""
    # Embedding / bias gathers stay in XLA (see TODO at top of file about
    # fusing them for large emd_size).
    node_emb = node_emd[node_ids].astype(jnp.float32)              # (B, D)
    neigh_emb = node_emd[neighbor_ids].astype(jnp.float32)         # (B, D)
    bias = bias_vector[neighbor_ids].astype(jnp.float32)[:, None]  # (B, 1)
    reward2d = jnp.asarray(reward)[:, None]                        # (B, 1)

    B, D = node_emb.shape

    # Tile over the batch so the kernel pipelines and scales past VMEM.
    tb = min(_round_up(max_tile_b, 8), _round_up(B, 8))
    b_pad = _round_up(B, tb)
    if b_pad != B:
        pad = b_pad - B
        # Zero padding is exact: reward==0 kills the CE term; zero embedding
        # rows / zero bias contribute nothing to the L2 term.
        node_emb = jnp.pad(node_emb, ((0, pad), (0, 0)))
        neigh_emb = jnp.pad(neigh_emb, ((0, pad), (0, 0)))
        bias = jnp.pad(bias, ((0, pad), (0, 0)))
        reward2d = jnp.pad(reward2d, ((0, pad), (0, 0)))

    num_tiles = b_pad // tb

    # VMEM budget: 2 embedding inputs + 2 (TB,1) inputs (lane-padded to 128),
    # double-buffered, f32.  2x headroom, 16 MiB floor -> safe on v5e/v6e/v7x.
    d_pad = max(_round_up(D, 128), 128)
    vmem_est = 4 * 2 * (2 * tb * d_pad + 2 * tb * 128)
    vmem_limit = max(2 * vmem_est, 16 * 1024 * 1024)

    kernel = functools.partial(_gen_loss_kernel,
                               lambda_gen=float(lambda_gen),
                               inv_batch=1.0 / float(B))

    loss = pl.pallas_call(
        kernel,
        out_shape=jax.ShapeDtypeStruct((1, 1), jnp.float32),
        grid_spec=pltpu.PrefetchScalarGridSpec(
            num_scalar_prefetch=0,
            grid=(num_tiles,),
            in_specs=[
                pl.BlockSpec((tb, D), lambda i: (i, 0)),
                pl.BlockSpec((tb, D), lambda i: (i, 0)),
                pl.BlockSpec((tb, 1), lambda i: (i, 0)),
                pl.BlockSpec((tb, 1), lambda i: (i, 0)),
            ],
            out_specs=pl.BlockSpec((1, 1), lambda i: (0, 0)),
            scratch_shapes=[pltpu.VMEM((1, 1), jnp.float32),
                            pltpu.VMEM((1, 1), jnp.float32)],
        ),
        compiler_params=pltpu.CompilerParams(
            dimension_semantics=("arbitrary",),
            vmem_limit_bytes=int(vmem_limit)),
    )(node_emb, neigh_emb, bias, reward2d)

    return loss[0, 0]


def _reference_loss(node_emd, bias_vector, node_ids, neighbor_ids, reward,
                    lambda_gen):
    node_emb = node_emd[node_ids]
    neigh_emb = node_emd[neighbor_ids]
    bias = bias_vector[neighbor_ids]
    score = jnp.sum(node_emb * neigh_emb, axis=1) + bias
    prob = jnp.clip(jax.nn.sigmoid(score), 1e-5, 1.0)
    l2 = 0.5 * (jnp.sum(node_emb ** 2) + jnp.sum(neigh_emb ** 2)
                + jnp.sum(bias ** 2))
    return -jnp.mean(jnp.log(prob) * reward) + lambda_gen * l2


if __name__ == "__main__":
    key = jax.random.PRNGKey(0)
    k_emb, k_nid, k_nbr, k_rwd, k_bias = jax.random.split(key, 5)

    n_node, emd_size = 16, 32     # node_emd_init.shape
    batch = 20                    # not a multiple of the tile -> exercises padding
    lambda_gen = 1e-5

    # Deterministic "pretrained" embedding init + (normally zero) bias vector;
    # small random bias used so the gather path is exercised non-trivially.
    node_emd = jax.random.normal(k_emb, (n_node, emd_size), dtype=jnp.float32) * 0.1
    bias_vector = jax.random.normal(k_bias, (n_node,), dtype=jnp.float32) * 0.01

    node_ids = jax.random.randint(k_nid, (batch,), 0, n_node)
    neighbor_ids = jax.random.randint(k_nbr, (batch,), 0, n_node)
    reward = jax.random.uniform(k_rwd, (batch,), dtype=jnp.float32)

    # Small tile (8 rows) so the demo runs multiple accumulation grid steps.
    loss_fn = jax.jit(functools.partial(generator_loss,
                                        lambda_gen=lambda_gen, max_tile_b=8))
    loss = loss_fn(node_emd, bias_vector, node_ids, neighbor_ids, reward)
    loss = jax.block_until_ready(loss)

    ref = _reference_loss(node_emd, bias_vector, node_ids, neighbor_ids,
                          reward, lambda_gen)
    assert jnp.allclose(loss, ref, rtol=1e-5, atol=1e-5), (loss, ref)

    print("KERNEL_OK")
</pallas_src>

<mosaic_0001>
module attributes {stable_mosaic.version = 11 : i64} {
  func.func @_gen_loss_kernel(%arg0: i32, %arg1: memref<8x32xf32, #tpu.memory_space<vmem>>, %arg2: memref<8x32xf32, #tpu.memory_space<vmem>>, %arg3: memref<8x1xf32, #tpu.memory_space<vmem>>, %arg4: memref<8x1xf32, #tpu.memory_space<vmem>>, %arg5: memref<1x1xf32, #tpu.memory_space<vmem>>, %arg6: memref<1x1xf32, #tpu.memory_space<vmem>>, %arg7: memref<1x1xf32, #tpu.memory_space<vmem>>) attributes {dimension_semantics = [#tpu.dimension_semantics<arbitrary>], iteration_bounds = array<i64: 3>, scalar_prefetch = 0 : i64, scratch_operands = 2 : i64, tpu.core_type = #tpu.core_type<tc>, window_params = [{transform_indices = @transform_0, window_bounds = array<i64: 8, 32>}, {transform_indices = @transform_1, window_bounds = array<i64: 8, 32>}, {transform_indices = @transform_2, window_bounds = array<i64: 8, 1>}, {transform_indices = @transform_3, window_bounds = array<i64: 8, 1>}, {pipeline_mode = #tpu.pipeline_mode<synchronous>, transform_indices = @transform_4, window_bounds = array<i64: 1, 1>}]} {
    %c0_i32 = arith.constant 0 : i32
    %0 = arith.cmpi eq, %arg0, %c0_i32 : i32
    %1 = arith.extui %0 : i1 to i32
    %c0_i32_0 = arith.constant 0 : i32
    %2 = arith.cmpi ne, %1, %c0_i32_0 : i32
    scf.if %2 {
      %cst_25 = arith.constant 0.000000e+00 : f32
      %61 = vector.broadcast %cst_25 : f32 to vector<1x1xf32>
      %c0_26 = arith.constant 0 : index
      %c0_27 = arith.constant 0 : index
      %62 = vector.load %arg6[%c0_26, %c0_27] : memref<1x1xf32, #tpu.memory_space<vmem>>, vector<1x1xf32>
      tpu.vector_store %arg6[%c0_26, %c0_27], %61 {strides = array<i32>} : memref<1x1xf32, #tpu.memory_space<vmem>>, vector<1x1xf32>,
      %cst_28 = arith.constant 0.000000e+00 : f32
      %63 = vector.broadcast %cst_28 : f32 to vector<1x1xf32>
      %c0_29 = arith.constant 0 : index
      %c0_30 = arith.constant 0 : index
      %64 = vector.load %arg7[%c0_29, %c0_30] : memref<1x1xf32, #tpu.memory_space<vmem>>, vector<1x1xf32>
      tpu.vector_store %arg7[%c0_29, %c0_30], %63 {strides = array<i32>} : memref<1x1xf32, #tpu.memory_space<vmem>>, vector<1x1xf32>,
    } else {
    }
    %c0 = arith.constant 0 : index
    %c0_1 = arith.constant 0 : index
    %3 = vector.load %arg1[%c0, %c0_1] : memref<8x32xf32, #tpu.memory_space<vmem>>, vector<8x32xf32>
    %c0_2 = arith.constant 0 : index
    %c0_3 = arith.constant 0 : index
    %4 = vector.load %arg2[%c0_2, %c0_3] : memref<8x32xf32, #tpu.memory_space<vmem>>, vector<8x32xf32>
    %c0_4 = arith.constant 0 : index
    %c0_5 = arith.constant 0 : index
    %5 = vector.load %arg3[%c0_4, %c0_5] : memref<8x1xf32, #tpu.memory_space<vmem>>, vector<8x1xf32>
    %c0_6 = arith.constant 0 : index
    %c0_7 = arith.constant 0 : index
    %6 = vector.load %arg4[%c0_6, %c0_7] : memref<8x1xf32, #tpu.memory_space<vmem>>, vector<8x1xf32>
    %7 = arith.mulf %3, %4 : vector<8x32xf32>
    %cst = arith.constant dense<0.000000e+00> : vector<8xf32>
    %8 = vector.multi_reduction <add>, %7, %cst [1] : vector<8x32xf32> to vector<8xf32>
    %9 = vector.shape_cast %8 : vector<8xf32> to vector<8x1xf32>
    %10 = arith.addf %9, %5 : vector<8x1xf32>
    %cst_8 = arith.constant 0.000000e+00 : f32
    %11 = vector.broadcast %cst_8 : f32 to vector<8x1xf32>
    %12 = arith.subf %11, %10 : vector<8x1xf32>
    %cst_9 = arith.constant 0.000000e+00 : f32
    %13 = vector.broadcast %cst_9 : f32 to vector<8x1xf32>
    %14 = arith.maximumf %12, %13 : vector<8x1xf32>
    %15 = vector.broadcast %cst_9 : f32 to vector<8x1xf32>
    %16 = arith.subf %12, %15 : vector<8x1xf32>
    %17 = arith.cmpf one, %16, %16 : vector<8x1xf32>
    %18 = vector.broadcast %cst_9 : f32 to vector<8x1xf32>
    %19 = arith.addf %12, %18 : vector<8x1xf32>
    %20 = math.absf %16 : vector<8x1xf32>
    %cst_10 = arith.constant 0.000000e+00 : f32
    %21 = vector.broadcast %cst_10 : f32 to vector<8x1xf32>
    %22 = arith.subf %21, %20 : vector<8x1xf32>
    %23 = math.exp %22 : vector<8x1xf32>
    %24 = math.log1p %23 : vector<8x1xf32>
    %25 = arith.addf %14, %24 : vector<8x1xf32>
    %26 = arith.select %17, %19, %25 : vector<8x1xi1>, vector<8x1xf32>
    %cst_11 = arith.constant 0.000000e+00 : f32
    %27 = vector.broadcast %cst_11 : f32 to vector<8x1xf32>
    %28 = arith.subf %27, %26 : vector<8x1xf32>
    %cst_12 = arith.constant -11.5129251 : f32
    %29 = vector.broadcast %cst_12 : f32 to vector<8x1xf32>
    %30 = arith.maximumf %28, %29 : vector<8x1xf32>
    %c0_13 = arith.constant 0 : index
    %c0_14 = arith.constant 0 : index
    %31 = vector.load %arg6[%c0_13, %c0_14] : memref<1x1xf32, #tpu.memory_space<vmem>>, vector<1x1xf32>
    %32 = arith.mulf %30, %6 : vector<8x1xf32>
    %33 = vector.shape_cast %32 : vector<8x1xf32> to vector<1x8x1xf32>
    %cst_15 = arith.constant dense<0.000000e+00> : vector<1xf32>
    %34 = vector.multi_reduction <add>, %33, %cst_15 [1, 2] : vector<1x8x1xf32> to vector<1xf32>
    %35 = vector.shape_cast %34 : vector<1xf32> to vector<1x1x1xf32>
    %36 = vector.extract %35[0, 0, 0] : f32 from vector<1x1x1xf32>
    %37 = vector.broadcast %36 : f32 to vector<1x1xf32>
    %38 = arith.addf %31, %37 : vector<1x1xf32>
    %c0_16 = arith.constant 0 : index
    %c0_17 = arith.constant 0 : index
    %39 = vector.load %arg6[%c0_16, %c0_17] : memref<1x1xf32, #tpu.memory_space<vmem>>, vector<1x1xf32>
    tpu.vector_store %arg6[%c0_16, %c0_17], %38 {strides = array<i32>} : memref<1x1xf32, #tpu.memory_space<vmem>>, vector<1x1xf32>,
    %40 = arith.mulf %3, %3 : vector<8x32xf32>
    %41 = arith.mulf %4, %4 : vector<8x32xf32>
    %42 = arith.addf %40, %41 : vector<8x32xf32>
    %c0_18 = arith.constant 0 : index
    %c0_19 = arith.constant 0 : index
    %43 = vector.load %arg7[%c0_18, %c0_19] : memref<1x1xf32, #tpu.memory_space<vmem>>, vector<1x1xf32>
    %44 = vector.shape_cast %42 : vector<8x32xf32> to vector<1x8x32xf32>
    %cst_20 = arith.constant dense<0.000000e+00> : vector<1xf32>
    %45 = vector.multi_reduction <add>, %44, %cst_20 [1, 2] : vector<1x8x32xf32> to vector<1xf32>
    %46 = vector.shape_cast %45 : vector<1xf32> to vector<1x1x1xf32>
    %47 = vector.extract %46[0, 0, 0] : f32 from vector<1x1x1xf32>
    %48 = vector.broadcast %47 : f32 to vector<1x1xf32>
    %49 = arith.addf %43, %48 : vector<1x1xf32>
    %50 = arith.mulf %5, %5 : vector<8x1xf32>
    %51 = vector.shape_cast %50 : vector<8x1xf32> to vector<1x8x1xf32>
    %cst_21 = arith.constant dense<0.000000e+00> : vector<1xf32>
    %52 = vector.multi_reduction <add>, %51, %cst_21 [1, 2] : vector<1x8x1xf32> to vector<1xf32>
    %53 = vector.shape_cast %52 : vector<1xf32> to vector<1x1x1xf32>
    %54 = vector.extract %53[0, 0, 0] : f32 from vector<1x1x1xf32>
    %55 = vector.broadcast %54 : f32 to vector<1x1xf32>
    %56 = arith.addf %49, %55 : vector<1x1xf32>
    %c0_22 = arith.constant 0 : index
    %c0_23 = arith.constant 0 : index
    %57 = vector.load %arg7[%c0_22, %c0_23] : memref<1x1xf32, #tpu.memory_space<vmem>>, vector<1x1xf32>
    tpu.vector_store %arg7[%c0_22, %c0_23], %56 {strides = array<i32>} : memref<1x1xf32, #tpu.memory_space<vmem>>, vector<1x1xf32>,
    %c2_i32 = arith.constant 2 : i32
    %58 = arith.cmpi eq, %arg0, %c2_i32 : i32
    %59 = arith.extui %58 : i1 to i32
    %c0_i32_24 = arith.constant 0 : i32
    %60 = arith.cmpi ne, %59, %c0_i32_24 : i32
    scf.if %60 {
      %c0_25 = arith.constant 0 : index
      %c0_26 = arith.constant 0 : index
      %61 = vector.load %arg6[%c0_25, %c0_26] : memref<1x1xf32, #tpu.memory_space<vmem>>, vector<1x1xf32>
      %cst_27 = arith.constant 0.000000e+00 : f32
      %62 = vector.broadcast %cst_27 : f32 to vector<1x1xf32>
      %63 = arith.subf %62, %61 : vector<1x1xf32>
      %cst_28 = arith.constant 5.000000e-02 : f32
      %64 = vector.broadcast %cst_28 : f32 to vector<1x1xf32>
      %65 = arith.mulf %63, %64 : vector<1x1xf32>
      %c0_29 = arith.constant 0 : index
      %c0_30 = arith.constant 0 : index
      %66 = vector.load %arg7[%c0_29, %c0_30] : memref<1x1xf32, #tpu.memory_space<vmem>>, vector<1x1xf32>
      %cst_31 = arith.constant 5.000000e-06 : f32
      %67 = vector.broadcast %cst_31 : f32 to vector<1x1xf32>
      %68 = arith.mulf %67, %66 : vector<1x1xf32>
      %69 = arith.addf %65, %68 : vector<1x1xf32>
      %c0_32 = arith.constant 0 : index
      %c0_33 = arith.constant 0 : index
      %70 = vector.load %arg5[%c0_32, %c0_33] : memref<1x1xf32, #tpu.memory_space<vmem>>, vector<1x1xf32>
      tpu.vector_store %arg5[%c0_32, %c0_33], %69 {strides = array<i32>} : memref<1x1xf32, #tpu.memory_space<vmem>>, vector<1x1xf32>,
    } else {
    }
    return
  }
  func.func @transform_0(%arg0: i32) -> (i32, i32) {
    %c0_i32 = arith.constant 0 : i32
    %c0_i32_0 = arith.constant 0 : i32
    return %arg0, %c0_i32 : i32, i32
  }
  func.func @transform_1(%arg0: i32) -> (i32, i32) {
    %c0_i32 = arith.constant 0 : i32
    %c0_i32_0 = arith.constant 0 : i32
    return %arg0, %c0_i32 : i32, i32
  }
  func.func @transform_2(%arg0: i32) -> (i32, i32) {
    %c0_i32 = arith.constant 0 : i32
    %c0_i32_0 = arith.constant 0 : i32
    return %arg0, %c0_i32 : i32, i32
  }
  func.func @transform_3(%arg0: i32) -> (i32, i32) {
    %c0_i32 = arith.constant 0 : i32
    %c0_i32_0 = arith.constant 0 : i32
    return %arg0, %c0_i32 : i32, i32
  }
  func.func @transform_4(%arg0: i32) -> (i32, i32) {
    %c0_i32 = arith.constant 0 : i32
    %c0_i32_0 = arith.constant 0 : i32
    %c0_i32_1 = arith.constant 0 : i32
    return %c0_i32, %c0_i32_0 : i32, i32
  }
}

</mosaic_0001>

<llo_original>
// kernel: generator_loss.1
$region0: #{generator_loss.1}
  #allocation0 [shape = 'u32[]', space=smem, size = 0x4, offset = 0x4, fixed_abs, tag = 'smem constant byte address 0x4 - core index']
  #allocation1 [shape = 'u32[144,128]{1,0:T(1,128)}', space=vmem, size = 0x12000, scoped, tag = 'internal scratch']
  #allocation2 [shape = 'f32[1,1]{1,0:T(1,128)}', space=vmem, size = 0x200, scoped, tag = 'scratch operand']
  #allocation3 [shape = 'f32[1,1]{1,0:T(1,128)}', space=vmem, size = 0x200, scoped, tag = 'scratch operand']
  %s0 = inlined_call_operand.vmem [shape: f32[24,32], index: 0, kind: input, shape index: {}]
  %s1 = inlined_call_operand.vmem [shape: f32[24,32], index: 1, kind: input, shape index: {}]
  %s2 = inlined_call_operand.vmem [shape: f32[24,1], index: 2, kind: input, shape index: {}]
  %s3 = inlined_call_operand.vmem [shape: f32[24,1], index: 3, kind: input, shape index: {}]
  %s4 = inlined_call_operand.hbm [shape: f32[1,1], index: 4, kind: output, shape index: {}]
  %s5 = sld [smem:[#allocation0]]
  $region57: #{generator_loss.1} parent=0
    _
  %s7 = ssub.s32 1, %s5
  %s8 = scalar_select 0, %s7, %s5
  $region1: #{generator_loss.1} parent=0
    #allocation4 [shape = 'u8[512]{0}', space=vmem, size = 0x400, scoped, tag = 'output window, operand 0, single buffered']
    #allocation5 [shape = 's32[2]{0}', space=sflag, size = 0x8, scoped, tag = 'scoped memory for generator_loss.1']
    %9 = vsyncpa [#allocation5], 0
    loop: start=0, step=1, limit=5
    $region2: #{generator_loss.1} parent=1 // loop_pre_header
      _
    $region3: #{generator_loss.1} parent=1 // loop_header
      %s11 = sphi 0, %s15
      %p12 = scmp.ge.s32.totalorder %s11, 5
      %s21 = sphi 0, %s23
      %s24 = sphi 0, %s21
      %s25 = sphi 0, %s24
      %s41 = sphi 0, %s25
      %s47 = sphi 0, %s49
      %s50 = sphi 0, %s47
      %s51 = sphi 0, %s50
      %s67 = sphi 0, %s51
      %s73 = sphi 0, %s75
      %s76 = sphi 0, %s73
      %s77 = sphi 0, %s76
      %s93 = sphi 0, %s77
      %s99 = sphi 0, %s101
      %s102 = sphi 0, %s99
      %s103 = sphi 0, %s102
      %s119 = sphi 0, %s103
      %s123 = sphi 0, %s123
      %s125 = sphi 0, %s123
      %s126 = sphi 0, %s125
      %s140 = sphi 0, %s126
    $region4: #{generator_loss.1} parent=1 // loop_header_branch
      %14 = sbr.rel (%p12) target = $region8
    $region5: #{generator_loss.1} parent=1 // loop_body
      %s16 = ssub.s32 %s11, 1
      %s17 = ssub.s32 %s11, 2
      %s18 = sadd.s32 %s11, 1
      %s19 = ssub.s32 %s11, %s18
      %p20 = scmp.eq.s32.totalorder %s19, 0
      %s22 = sadd.s32 %s21, 1
      %s23 = scalar_select %p20, %s21, %s22
      %p26 = pneg %p20
      %p27 = scmp.eq.s32.totalorder %s11, 2
      %p28 = por %p26, %p27
      %p29 = scmp.ne.s32.totalorder %s21, %s24
      %p30 = scmp.eq.s32.totalorder %s11, 0
      %p31 = por %p29, %p30
      %p32 = scmp.ne.s32.totalorder %s21, %s24
      %p33 = scmp.eq.s32.totalorder %s16, 2
      %p34 = por %p32, %p33
      %p35 = scmp.ne.s32.totalorder %s24, %s25
      %p36 = scmp.eq.s32.totalorder %s16, 0
      %p37 = por %p35, %p36
      %p38 = scmp.ne.s32.totalorder %s24, %s25
      %p39 = scmp.eq.s32.totalorder %s17, 2
      %p40 = por %p38, %p39
      %p42 = scmp.ne.s32.totalorder %s25, %s41
      %p43 = scmp.eq.s32.totalorder %s17, 0
      %p44 = por %p42, %p43
      %s45 = ssub.s32 %s11, %s18
      %p46 = scmp.eq.s32.totalorder %s45, 0
      %s48 = sadd.s32 %s47, 1
      %s49 = scalar_select %p46, %s47, %s48
      %p52 = pneg %p46
      %p53 = scmp.eq.s32.totalorder %s11, 2
      %p54 = por %p52, %p53
      %p55 = scmp.ne.s32.totalorder %s47, %s50
      %p56 = scmp.eq.s32.totalorder %s11, 0
      %p57 = por %p55, %p56
      %p58 = scmp.ne.s32.totalorder %s47, %s50
      %p59 = scmp.eq.s32.totalorder %s16, 2
      %p60 = por %p58, %p59
      %p61 = scmp.ne.s32.totalorder %s50, %s51
      %p62 = scmp.eq.s32.totalorder %s16, 0
      %p63 = por %p61, %p62
      %p64 = scmp.ne.s32.totalorder %s50, %s51
      %p65 = scmp.eq.s32.totalorder %s17, 2
      %p66 = por %p64, %p65
      %p68 = scmp.ne.s32.totalorder %s51, %s67
      %p69 = scmp.eq.s32.totalorder %s17, 0
      %p70 = por %p68, %p69
      %s71 = ssub.s32 %s11, %s18
      %p72 = scmp.eq.s32.totalorder %s71, 0
      %s74 = sadd.s32 %s73, 1
      %s75 = scalar_select %p72, %s73, %s74
      %p78 = pneg %p72
      %p79 = scmp.eq.s32.totalorder %s11, 2
      %p80 = por %p78, %p79
      %p81 = scmp.ne.s32.totalorder %s73, %s76
      %p82 = scmp.eq.s32.totalorder %s11, 0
      %p83 = por %p81, %p82
      %p84 = scmp.ne.s32.totalorder %s73, %s76
      %p85 = scmp.eq.s32.totalorder %s16, 2
      %p86 = por %p84, %p85
      %p87 = scmp.ne.s32.totalorder %s76, %s77
      %p88 = scmp.eq.s32.totalorder %s16, 0
      %p89 = por %p87, %p88
      %p90 = scmp.ne.s32.totalorder %s76, %s77
      %p91 = scmp.eq.s32.totalorder %s17, 2
      %p92 = por %p90, %p91
      %p94 = scmp.ne.s32.totalorder %s77, %s93
      %p95 = scmp.eq.s32.totalorder %s17, 0
      %p96 = por %p94, %p95
      %s97 = ssub.s32 %s11, %s18
      %p98 = scmp.eq.s32.totalorder %s97, 0
      %s100 = sadd.s32 %s99, 1
      %s101 = scalar_select %p98, %s99, %s100
      %p104 = pneg %p98
      %p105 = scmp.eq.s32.totalorder %s11, 2
      %p106 = por %p104, %p105
      %p107 = scmp.ne.s32.totalorder %s99, %s102
      %p108 = scmp.eq.s32.totalorder %s11, 0
      %p109 = por %p107, %p108
      %p110 = scmp.ne.s32.totalorder %s99, %s102
      %p111 = scmp.eq.s32.totalorder %s16, 2
      %p112 = por %p110, %p111
      %p113 = scmp.ne.s32.totalorder %s102, %s103
      %p114 = scmp.eq.s32.totalorder %s16, 0
      %p115 = por %p113, %p114
      %p116 = scmp.ne.s32.totalorder %s102, %s103
      %p117 = scmp.eq.s32.totalorder %s17, 2
      %p118 = por %p116, %p117
      %p120 = scmp.ne.s32.totalorder %s103, %s119
      %p121 = scmp.eq.s32.totalorder %s17, 0
      %p122 = por %p120, %p121
      %s124 = sadd.s32 %s123, 1
      %p127 = scmp.eq.s32.totalorder %s11, 2
      %p128 = scmp.ne.s32.totalorder %s123, %s125
      %p129 = scmp.eq.s32.totalorder %s11, 0
      %p130 = por %p128, %p129
      %p131 = scmp.ne.s32.totalorder %s123, %s125
      %p132 = scmp.eq.s32.totalorder %s16, 2
      %p133 = por %p131, %p132
      %p134 = scmp.ne.s32.totalorder %s125, %s126
      %p135 = scmp.eq.s32.totalorder %s16, 0
      %p136 = por %p134, %p135
      %p137 = scmp.ne.s32.totalorder %s125, %s126
      %p138 = scmp.eq.s32.totalorder %s17, 2
      %p139 = por %p137, %p138
      %p141 = scmp.ne.s32.totalorder %s126, %s140
      %p142 = scmp.eq.s32.totalorder %s17, 0
      %p143 = por %p141, %p142
      %p144 = scmp.le.s32.totalorder 1, %s11
      %p145 = scmp.lt.s32.totalorder %s11, 4
      %p146 = pnand %p144, %p145
      %p147 = pneg %p146
      // Predicated region
      $region9: #{generator_loss.1} parent=5 // pred_check
        _
      $region10: #{generator_loss.1} parent=5 // pred_check_branch
        %149 = sbr.rel (%p146) target = $region12
      $region11: #{generator_loss.1} parent=5 // pred_region
        %s150 = ssub.s32 %s11, 1
      $region12: #{generator_loss.1} parent=5 // pred_fallthru
        _
      %p151 = scmp.lt.s32.totalorder %s11, 3
      // Predicated region
      $region13: #{generator_loss.1} parent=5 // pred_check
        %p152 = pneg %p151
      $region14: #{generator_loss.1} parent=5 // pred_check_branch
        %154 = sbr.rel (%p152) target = $region16
      $region15: #{generator_loss.1} parent=5 // pred_region
        // Predicated region
        $region17: #{generator_loss.1} parent=15 // pred_check
          %p155 = pneg %p31
        $region18: #{generator_loss.1} parent=15 // pred_check_branch
          %157 = sbr.rel (%p155) target = $region20
        $region19: #{generator_loss.1} parent=15 // pred_region
          %p158 = scmp.lt.s32.totalorder %s11, 2
          %s159 = scalar_select %p158, %s11, 2
          %s160 = smul.addr %s159, 8
          %s161 = scalar_lea.vmem %s0, %s160
        $region20: #{generator_loss.1} parent=15 // pred_fallthru
          _
        // Predicated region
        $region21: #{generator_loss.1} parent=15 // pred_check
          %p162 = pneg %p57
        $region22: #{generator_loss.1} parent=15 // pred_check_branch
          %164 = sbr.rel (%p162) target = $region24
        $region23: #{generator_loss.1} parent=15 // pred_region
          %p165 = scmp.lt.s32.totalorder %s11, 2
          %s166 = scalar_select %p165, %s11, 2
          %s167 = smul.addr %s166, 8
          %s168 = scalar_lea.vmem %s1, %s167
        $region24: #{generator_loss.1} parent=15 // pred_fallthru
          _
        // Predicated region
        $region25: #{generator_loss.1} parent=15 // pred_check
          %p169 = pneg %p83
        $region26: #{generator_loss.1} parent=15 // pred_check_branch
          %171 = sbr.rel (%p169) target = $region28
        $region27: #{generator_loss.1} parent=15 // pred_region
          %p172 = scmp.lt.s32.totalorder %s11, 2
          %s173 = scalar_select %p172, %s11, 2
          %s174 = smul.addr %s173, 8
          %s175 = scalar_lea.vmem %s2, %s174
        $region28: #{generator_loss.1} parent=15 // pred_fallthru
          _
        // Predicated region
        $region29: #{generator_loss.1} parent=15 // pred_check
          %p176 = pneg %p109
        $region30: #{generator_loss.1} parent=15 // pred_check_branch
          %178 = sbr.rel (%p176) target = $region32
        $region31: #{generator_loss.1} parent=15 // pred_region
          %p179 = scmp.lt.s32.totalorder %s11, 2
          %s180 = scalar_select %p179, %s11, 2
          %s181 = smul.addr %s180, 8
          %s182 = scalar_lea.vmem %s3, %s181
        $region32: #{generator_loss.1} parent=15 // pred_fallthru
          _
      $region16: #{generator_loss.1} parent=5 // pred_fallthru
        _
      %p183 = scmp.le.s32.totalorder 1, %s11
      %p184 = scmp.lt.s32.totalorder %s11, 4
      %p185 = pnand %p183, %p184
      %p186 = pneg %p185
      // Predicated region
      $region33: #{generator_loss.1} parent=5 // pred_check
        _
      $region34: #{generator_loss.1} parent=5 // pred_check_branch
        %188 = sbr.rel (%p185) target = $region36
      $region35: #{generator_loss.1} parent=5 // pred_region
        %s189 = ssub.s32 %s11, 1
        %p190 = scmp.lt.s32.totalorder %s16, 2
        %s191 = scalar_select %p190, %s16, 2
        %s192 = smul.addr %s191, 8
        %s193 = scalar_lea.vmem %s0, %s192
        %p194 = pneg %p37
        %p195 = pneg %p34
        %p196 = scmp.lt.s32.totalorder %s16, 2
        %s197 = scalar_select %p196, %s16, 2
        %s198 = smul.addr %s197, 8
        %s199 = scalar_lea.vmem %s1, %s198
        %p200 = pneg %p63
        %p201 = pneg %p60
        %p202 = scmp.lt.s32.totalorder %s16, 2
        %s203 = scalar_select %p202, %s16, 2
        %s204 = smul.addr %s203, 8
        %s205 = scalar_lea.vmem %s2, %s204
        %p206 = pneg %p89
        %p207 = pneg %p86
        %p208 = scmp.lt.s32.totalorder %s16, 2
        %s209 = scalar_select %p208, %s16, 2
        %s210 = smul.addr %s209, 8
        %s211 = scalar_lea.vmem %s3, %s210
        %p212 = pneg %p115
        %p213 = pneg %p112
        %p214 = pneg %p136
        %p215 = pneg %p133
        %p216 = scmp.lt.s32.totalorder %s16, 2
        %s217 = scalar_select %p216, %s16, 2
        %s218 = smul.addr %s217, 8
        %s219 = scalar_lea.vmem %s0, %s218
        %p220 = scmp.lt.s32.totalorder %s16, 2
        %s221 = scalar_select %p220, %s16, 2
        %s222 = smul.addr %s221, 8
        %s223 = scalar_lea.vmem %s1, %s222
        %p224 = scmp.lt.s32.totalorder %s16, 2
        %s225 = scalar_select %p224, %s16, 2
        %s226 = smul.addr %s225, 8
        %s227 = scalar_lea.vmem %s2, %s226
        %p228 = scmp.lt.s32.totalorder %s16, 2
        %s229 = scalar_select %p228, %s16, 2
        %s230 = smul.addr %s229, 8
        %s231 = scalar_lea.vmem %s3, %s230
        %p232 = scmp.eq.s32.totalorder %s16, 0
        // Predicated region
        $region37: #{generator_loss.1} parent=35 // pred_check
          %p233 = pneg %p232
        $region38: #{generator_loss.1} parent=35 // pred_check_branch
          %235 = sbr.rel (%p233) target = $region40
        $region39: #{generator_loss.1} parent=35 // pred_region
          %vm236 = vcmask 0
          %237 = vst.msk [vmem:[#allocation2] sm:$0x1] %vm236, 0.0
          %238 = vst.msk [vmem:[#allocation3] sm:$0x1] %vm236, 0.0
        $region40: #{generator_loss.1} parent=35 // pred_fallthru
          _
        %v239 = vld [vmem:[%s219] sm:$0xff]
        %v240 = vld [vmem:[%s223] sm:$0xff]
        %v241 = vld [vmem:[%s227] sm:$0xff]
        %v242 = vld [vmem:[%s231] sm:$0xff]
        %v243 = vmul.f32 %v239, %v240
        %vm244 = vcmask 261120
        %v245 = vsel %vm244, %v243, 0.0
        %246 = vadd.xlane.f32.xlu0 %v245
        %v247 = vpop.xlane.xlu0 %246
        %v248 = vadd.f32 %v247, %v241
        %v249 = vsub.f32 0.0, %v248
        %v250 = vmax.f32 %v249, 0.0
        %vm251 = vcmp.ne.f32.partialorder %v249, %v249
        %v252 = vadd.f32 %v249, 0.0
        %v253 = vand.u32 2147483647, %v249
        %v254 = vsub.f32 0.0, %v253
        %v255 = vmul.f32 %v254, 1.442695
        %v256 = vpow.pop %v255
        %v257 = vadd.f32 %v256, 1.0
        %v258 = vlog2.pop %v257
        %v259 = vmul.f32 %v258, 0.6931472
        %v260 = vmul.f32 -0.5, %v256
        %v261 = vadd.f32 %v260, 1.0
        %v262 = vmul.f32 %v261, %v256
        %v263 = vand.u32 2147483647, %v256
        %vm264 = vcmp.lt.f32.partialorder %v263, 0.0004427343
        %v265 = vsel %vm264, %v262, %v259
        %v266 = vadd.f32 %v250, %v265
        %v267 = vsel %vm251, %v252, %v266
        %v268 = vsub.f32 0.0, %v267
        %v269 = vmax.f32 %v268, -11.512925
        %v270 = vld [vmem:[#allocation2] sm:$0x1]
        %v271 = vmul.f32 %v269, %v242
        %vm272 = vcmask 7168
        %v273 = vsel %vm272, %v271, 0.0
        %274 = vadd.xlane.f32.xlu0 %v273
        %v275 = vpop.xlane.xlu0 %274
        %v276 = vrot.slane %v275, 4
        %v277 = vadd.f32 %v275, %v276
        %v278 = vrot.slane %v277, 2
        %v279 = vadd.f32 %v277, %v278
        %v280 = vrot.slane %v279, 1
        %v281 = vadd.f32 %v279, %v280
        %s282 = vtos %v281
        %v283 = vstv %s282
        %v284 = vadd.f32 %v270, %v283
        %vm285 = vcmask 0
        %286 = vst.msk [vmem:[#allocation2] sm:$0x1] %vm285, %v284
        %v287 = vmul.f32 %v239, %v239
        %v288 = vmul.f32 %v240, %v240
        %v289 = vadd.f32 %v287, %v288
        %v290 = vld [vmem:[#allocation3] sm:$0x1]
        %v291 = vsel %vm244, %v289, 0.0
        %292 = vadd.xlane.f32.xlu0 %v291
        %v293 = vpop.xlane.xlu0 %292
        %v294 = vrot.slane %v293, 4
        %v295 = vadd.f32 %v293, %v294
        %v296 = vrot.slane %v295, 2
        %v297 = vadd.f32 %v295, %v296
        %v298 = vrot.slane %v297, 1
        %v299 = vadd.f32 %v297, %v298
        %s300 = vtos %v299
        %v301 = vstv %s300
        %v302 = vadd.f32 %v290, %v301
        %v303 = vmul.f32 %v241, %v241
        %v304 = vsel %vm272, %v303, 0.0
        %305 = vadd.xlane.f32.xlu0 %v304
        %v306 = vpop.xlane.xlu0 %305
        %v307 = vrot.slane %v306, 4
        %v308 = vadd.f32 %v306, %v307
        %v309 = vrot.slane %v308, 2
        %v310 = vadd.f32 %v308, %v309
        %v311 = vrot.slane %v310, 1
        %v312 = vadd.f32 %v310, %v311
        %s313 = vtos %v312
        %v314 = vstv %s313
        %v315 = vadd.f32 %v302, %v314
        %316 = vst.msk [vmem:[#allocation3] sm:$0x1] %vm285, %v315
        %p317 = scmp.eq.s32.totalorder %s16, 2
        // Predicated region
        $region41: #{generator_loss.1} parent=35 // pred_check
          %p318 = pneg %p317
        $region42: #{generator_loss.1} parent=35 // pred_check_branch
          %320 = sbr.rel (%p318) target = $region44
        $region43: #{generator_loss.1} parent=35 // pred_region
          %v321 = vld [vmem:[#allocation2] sm:$0x1]
          %v322 = vsub.f32 0.0, %v321
          %v323 = vmul.f32 %v322, 0.05
          %v324 = vld [vmem:[#allocation3] sm:$0x1]
          %v325 = vmul.f32 %v324, 5e-06
          %v326 = vadd.f32 %v323, %v325
          %327 = vst.msk [vmem:[#allocation4] sm:$0x1] %vm285, %v326
        $region44: #{generator_loss.1} parent=35 // pred_fallthru
          _
        // Predicated region
        $region45: #{generator_loss.1} parent=35 // pred_check
          %p328 = pneg %p133
        $region46: #{generator_loss.1} parent=35 // pred_check_branch
          %330 = sbr.rel (%p328) target = $region48
        $region47: #{generator_loss.1} parent=35 // pred_region
          %s332 = ssub.s32 16, 16
          %333 = vsyncadd [#allocation5], %s332
          %s335 = sshll.u32 [#allocation4], 4
          %s336 = int_to_ptr.vmem [resolvable:$true] %s335
          %338 = dma.vmem_to_hbm [thread:$0]  %s336, 16, %s4, [#allocation5]
        $region48: #{generator_loss.1} parent=35 // pred_fallthru
          _
        // Predicated region
        $region49: #{generator_loss.1} parent=35 // pred_check
          %p339 = pneg %p133
        $region50: #{generator_loss.1} parent=35 // pred_check_branch
          %341 = sbr.rel (%p339) target = $region52
        $region51: #{generator_loss.1} parent=35 // pred_region
          %342 = dma.done [#allocation5], 16
        $region52: #{generator_loss.1} parent=35 // pred_fallthru
          _
      $region36: #{generator_loss.1} parent=5 // pred_fallthru
        _
      %p343 = scmp.le.s32.totalorder 2, %s11
      // Predicated region
      $region53: #{generator_loss.1} parent=5 // pred_check
        %p344 = pneg %p343
      $region54: #{generator_loss.1} parent=5 // pred_check_branch
        %346 = sbr.rel (%p344) target = $region56
      $region55: #{generator_loss.1} parent=5 // pred_region
        %s347 = ssub.s32 %s11, 2
      $region56: #{generator_loss.1} parent=5 // pred_fallthru
        _
    $region6: #{generator_loss.1} parent=1 // loop_footer
      %s15 = sadd.s32 1, %s11
    $region7: #{generator_loss.1} parent=1 // loop_footer_branch
      %10 = sbr.rel target = $region3
    $region8: #{generator_loss.1} parent=1 // loop_exit
      _
    %348 = vsyncpa [#allocation5], 1
    %s349 = scalar_lea.sflag [#allocation5], 1
    %350 = vsyncpa %s349, 1

</llo_original>
